<compile_context>
chip_gen: v7x
topology: tpu7x:2x2x1
jax: 0.10.0
libtpu: 0.0.40
codegen_flags: <defaults>
</compile_context>

<pallas_src>
import jax
import jax.numpy as jnp
from jax.experimental import pallas as pl
from jax.experimental.pallas import tpu as pltpu

LANE = 128
NEG_BIG = -1e30  # exp(NEG_BIG - m) underflows to exactly 0 in f32


def _round_up(n, m):
    return ((n + m - 1) // m) * m


def mlp_kernel(x_ref, w1_ref, w2_ref, w3_ref, bias_ref, o_ref):
    # x_ref: (TB, d_in) f32; w1: (d_in, PW) bf16; w2/w3: (PW, PW) bf16;
    # bias: (3, PW) f32; o: (TB, PW) f32.
    # Cast the streamed x tile to bf16 in-register so all matmuls hit native MXU rate;
    # accumulate in f32 via preferred_element_type.
    x = x_ref[...].astype(jnp.bfloat16)

    h1 = jnp.dot(x, w1_ref[...], preferred_element_type=jnp.float32) + bias_ref[0:1, :]
    h1 = jnp.maximum(h1, 0.0)

    h2 = jnp.dot(h1.astype(jnp.bfloat16), w2_ref[...],
                 preferred_element_type=jnp.float32) + bias_ref[1:2, :]
    h2 = jnp.maximum(h2, 0.0)

    # Padded class columns carry a -1e30 bias -> they vanish from max/sum below.
    logits = jnp.dot(h2.astype(jnp.bfloat16), w3_ref[...],
                     preferred_element_type=jnp.float32) + bias_ref[2:3, :]

    # Numerically-stable softmax along the class axis (PyTorch dim=1).
    m = jnp.max(logits, axis=-1, keepdims=True)
    e = jnp.exp(logits - m)
    denom = jnp.sum(e, axis=-1, keepdims=True)
    # Exact reciprocal of the (TB, 1) column (approx=True was not accurate enough).
    o_ref[...] = (e * (1.0 / denom)).astype(o_ref.dtype)


def prepare_params(params):
    """One-time weight/bias padding + bf16 cast, hoisted out of the per-call path."""
    w1, b1, w2, b2, w3, b3 = (params[k] for k in ("w1", "b1", "w2", "b2", "w3", "b3"))
    d_in, hidden = w1.shape
    num_classes = w3.shape[1]
    p_w = _round_up(max(hidden, num_classes), LANE)  # shared padded width (hidden & classes)

    w1_p = jnp.pad(w1, ((0, 0), (0, p_w - hidden))).astype(jnp.bfloat16)
    w2_p = jnp.pad(w2, ((0, p_w - hidden), (0, p_w - hidden))).astype(jnp.bfloat16)
    w3_p = jnp.pad(w3, ((0, p_w - hidden), (0, p_w - num_classes))).astype(jnp.bfloat16)

    # Fused bias block (f32): row 0 = b1, row 1 = b2, row 2 = b3 (padded classes -> -1e30).
    b1_p = jnp.pad(b1, ((0, 0), (0, p_w - hidden)))
    b2_p = jnp.pad(b2, ((0, 0), (0, p_w - hidden)))
    b3_p = jnp.pad(b3, ((0, 0), (0, p_w - num_classes)), constant_values=NEG_BIG)
    bias = jnp.concatenate([b1_p, b2_p, b3_p], axis=0).astype(jnp.float32)  # (3, p_w)

    return {"w1": w1_p, "w2": w2_p, "w3": w3_p, "bias": bias,
            "d_in": d_in, "num_classes": num_classes, "p_w": p_w}


def _pick_batch_tiling(B):
    """Big batch tiles to amortize per-step overhead; >=2 steps for large B (v7x megacore)."""
    sub = 8  # f32 sublane alignment for the streamed x / out tiles
    if B <= 1024:
        tb = _round_up(max(B, sub), sub)                 # single step
    else:
        tb = min(2048, _round_up((B + 1) // 2, sub))     # >= 2 steps, capped tile
    b_pad = _round_up(B, tb)
    return tb, b_pad


def neural_network_forward(x, prep):
    """x: (B, input_dim) float32; prep: output of prepare_params()."""
    B, d_in = x.shape
    assert d_in == prep["d_in"]
    p_w = prep["p_w"]
    num_classes = prep["num_classes"]

    tb, b_pad = _pick_batch_tiling(B)
    x_p = x if b_pad == B else jnp.pad(x, ((0, b_pad - B), (0, 0)))  # batch pad only

    grid_spec = pltpu.PrefetchScalarGridSpec(
        num_scalar_prefetch=0,
        grid=(b_pad // tb,),
        in_specs=[
            # x streamed per batch tile; full feature extent (no HBM lane padding of x).
            pl.BlockSpec((tb, d_in), lambda i: (i, 0)),
            # Weights / fused bias: constant index_map -> resident in VMEM across steps.
            pl.BlockSpec((d_in, p_w), lambda i: (0, 0)),
            pl.BlockSpec((p_w, p_w), lambda i: (0, 0)),
            pl.BlockSpec((p_w, p_w), lambda i: (0, 0)),
            pl.BlockSpec((3, p_w), lambda i: (0, 0)),
        ],
        out_specs=pl.BlockSpec((tb, p_w), lambda i: (i, 0)),
    )

    out_padded = pl.pallas_call(
        mlp_kernel,
        out_shape=jax.ShapeDtypeStruct((b_pad, p_w), jnp.float32),
        grid_spec=grid_spec,
        compiler_params=pltpu.CompilerParams(dimension_semantics=("parallel",)),
    )(x_p, prep["w1"], prep["w2"], prep["w3"], prep["bias"])

    return out_padded[:B, :num_classes]


def init_params(key, input_dim, num_classes, hidden=50):
    # Deterministic synthetic init (uniform, PyTorch-Linear-like fan_in scaling).
    ks = jax.random.split(key, 6)

    def lin(kw, kb, fan_in, fan_out):
        bound = 1.0 / jnp.sqrt(fan_in)
        w = jax.random.uniform(kw, (fan_in, fan_out), jnp.float32, -bound, bound)
        b = jax.random.uniform(kb, (1, fan_out), jnp.float32, -bound, bound)
        return w, b

    w1, b1 = lin(ks[0], ks[1], input_dim, hidden)
    w2, b2 = lin(ks[2], ks[3], hidden, hidden)
    w3, b3 = lin(ks[4], ks[5], hidden, num_classes)
    return {"w1": w1, "b1": b1, "w2": w2, "b2": b2, "w3": w3, "b3": b3}


def reference_forward(x, p):
    h1 = jnp.maximum(x @ p["w1"] + p["b1"], 0.0)
    h2 = jnp.maximum(h1 @ p["w2"] + p["b2"], 0.0)
    return jax.nn.softmax(h2 @ p["w3"] + p["b3"], axis=1)


if __name__ == "__main__":
    key = jax.random.PRNGKey(0)
    k_x, k_p = jax.random.split(key)

    batch, input_dim, num_classes = 8, 32, 10
    x = jax.random.normal(k_x, (batch, input_dim), jnp.float32)
    params = init_params(k_p, input_dim, num_classes)

    prep = prepare_params(params)          # one-time padding / bf16 cast (hoisted)
    out = neural_network_forward(x, prep)
    out = jax.block_until_ready(out)

    ref = reference_forward(x, params)
    assert out.shape == (batch, num_classes)
    # bf16 matmul inputs (f32 accumulation) -> loosened tolerance vs the f32 reference.
    assert jnp.allclose(out, ref, atol=2e-2, rtol=2e-2), float(jnp.max(jnp.abs(out - ref)))
    # Exact softmax normalization: each row sums to 1.
    assert jnp.allclose(jnp.sum(out, axis=1), jnp.ones((batch,)), atol=1e-3)

    print("KERNEL_OK")
</pallas_src>

<mosaic_0001>
module attributes {stable_mosaic.version = 11 : i64} {
  func.func @mlp_kernel(%arg0: i32, %arg1: memref<8x32xf32, #tpu.memory_space<vmem>>, %arg2: memref<32x128xbf16, #tpu.memory_space<vmem>>, %arg3: memref<128x128xbf16, #tpu.memory_space<vmem>>, %arg4: memref<128x128xbf16, #tpu.memory_space<vmem>>, %arg5: memref<3x128xf32, #tpu.memory_space<vmem>>, %arg6: memref<8x128xf32, #tpu.memory_space<vmem>>) attributes {dimension_semantics = [#tpu.dimension_semantics<parallel>], iteration_bounds = array<i64: 1>, scalar_prefetch = 0 : i64, scratch_operands = 0 : i64, tpu.core_type = #tpu.core_type<tc>, window_params = [{transform_indices = @transform_0, window_bounds = array<i64: 8, 32>}, {pipeline_mode = #tpu.pipeline_mode<synchronous>, transform_indices = @transform_1, window_bounds = array<i64: 32, 128>}, {pipeline_mode = #tpu.pipeline_mode<synchronous>, transform_indices = @transform_2, window_bounds = array<i64: 128, 128>}, {pipeline_mode = #tpu.pipeline_mode<synchronous>, transform_indices = @transform_3, window_bounds = array<i64: 128, 128>}, {pipeline_mode = #tpu.pipeline_mode<synchronous>, transform_indices = @transform_4, window_bounds = array<i64: 3, 128>}, {transform_indices = @transform_5, window_bounds = array<i64: 8, 128>}]} {
    %c0 = arith.constant 0 : index
    %c0_0 = arith.constant 0 : index
    %0 = vector.load %arg1[%c0, %c0_0] : memref<8x32xf32, #tpu.memory_space<vmem>>, vector<8x32xf32>
    %1 = arith.truncf %0 : vector<8x32xf32> to vector<8x32xbf16>
    %c0_1 = arith.constant 0 : index
    %c0_2 = arith.constant 0 : index
    %2 = vector.load %arg2[%c0_1, %c0_2] : memref<32x128xbf16, #tpu.memory_space<vmem>>, vector<32x128xbf16>
    %cst = arith.constant dense<0.000000e+00> : vector<8x128xf32>
    %3 = tpu.matmul %1, %2, %cst {dimension_numbers = #tpu.dot_dimension_numbers<[1], [0], [0], [1], [0, 0, 1, 1], [], []>} : vector<8x32xbf16>, vector<32x128xbf16>, vector<8x128xf32> -> vector<8x128xf32>
    %c0_3 = arith.constant 0 : index
    %c0_4 = arith.constant 0 : index
    %4 = vector.load %arg5[%c0_3, %c0_4] : memref<3x128xf32, #tpu.memory_space<vmem>>, vector<1x128xf32>
    %5 = vector.broadcast %4 : vector<1x128xf32> to vector<8x128xf32>
    %6 = arith.addf %3, %5 : vector<8x128xf32>
    %cst_5 = arith.constant 0.000000e+00 : f32
    %7 = vector.broadcast %cst_5 : f32 to vector<8x128xf32>
    %8 = arith.maximumf %6, %7 : vector<8x128xf32>
    %9 = arith.truncf %8 : vector<8x128xf32> to vector<8x128xbf16>
    %c0_6 = arith.constant 0 : index
    %c0_7 = arith.constant 0 : index
    %10 = vector.load %arg3[%c0_6, %c0_7] : memref<128x128xbf16, #tpu.memory_space<vmem>>, vector<128x128xbf16>
    %cst_8 = arith.constant dense<0.000000e+00> : vector<8x128xf32>
    %11 = tpu.matmul %9, %10, %cst_8 {dimension_numbers = #tpu.dot_dimension_numbers<[1], [0], [0], [1], [0, 0, 1, 1], [], []>} : vector<8x128xbf16>, vector<128x128xbf16>, vector<8x128xf32> -> vector<8x128xf32>
    %c1 = arith.constant 1 : index
    %c0_9 = arith.constant 0 : index
    %12 = vector.load %arg5[%c1, %c0_9] : memref<3x128xf32, #tpu.memory_space<vmem>>, vector<1x128xf32>
    %13 = vector.broadcast %12 : vector<1x128xf32> to vector<8x128xf32>
    %14 = arith.addf %11, %13 : vector<8x128xf32>
    %cst_10 = arith.constant 0.000000e+00 : f32
    %15 = vector.broadcast %cst_10 : f32 to vector<8x128xf32>
    %16 = arith.maximumf %14, %15 : vector<8x128xf32>
    %17 = arith.truncf %16 : vector<8x128xf32> to vector<8x128xbf16>
    %c0_11 = arith.constant 0 : index
    %c0_12 = arith.constant 0 : index
    %18 = vector.load %arg4[%c0_11, %c0_12] : memref<128x128xbf16, #tpu.memory_space<vmem>>, vector<128x128xbf16>
    %cst_13 = arith.constant dense<0.000000e+00> : vector<8x128xf32>
    %19 = tpu.matmul %17, %18, %cst_13 {dimension_numbers = #tpu.dot_dimension_numbers<[1], [0], [0], [1], [0, 0, 1, 1], [], []>} : vector<8x128xbf16>, vector<128x128xbf16>, vector<8x128xf32> -> vector<8x128xf32>
    %c2 = arith.constant 2 : index
    %c0_14 = arith.constant 0 : index
    %20 = vector.load %arg5[%c2, %c0_14] : memref<3x128xf32, #tpu.memory_space<vmem>>, vector<1x128xf32>
    %21 = vector.broadcast %20 : vector<1x128xf32> to vector<8x128xf32>
    %22 = arith.addf %19, %21 : vector<8x128xf32>
    %cst_15 = arith.constant dense<0xFF800000> : vector<8xf32>
    %23 = vector.multi_reduction <maximumf>, %22, %cst_15 [1] : vector<8x128xf32> to vector<8xf32>
    %24 = vector.shape_cast %23 : vector<8xf32> to vector<8x1xf32>
    %25 = vector.broadcast %24 : vector<8x1xf32> to vector<8x128xf32>
    %26 = arith.subf %22, %25 : vector<8x128xf32>
    %27 = math.exp %26 : vector<8x128xf32>
    %cst_16 = arith.constant dense<0.000000e+00> : vector<8xf32>
    %28 = vector.multi_reduction <add>, %27, %cst_16 [1] : vector<8x128xf32> to vector<8xf32>
    %29 = vector.shape_cast %28 : vector<8xf32> to vector<8x1xf32>
    %cst_17 = arith.constant 1.000000e+00 : f32
    %30 = vector.broadcast %cst_17 : f32 to vector<8x1xf32>
    %31 = arith.divf %30, %29 : vector<8x1xf32>
    %32 = vector.broadcast %31 : vector<8x1xf32> to vector<8x128xf32>
    %33 = arith.mulf %27, %32 : vector<8x128xf32>
    %c0_18 = arith.constant 0 : index
    %c0_19 = arith.constant 0 : index
    %34 = vector.load %arg6[%c0_18, %c0_19] : memref<8x128xf32, #tpu.memory_space<vmem>>, vector<8x128xf32>
    tpu.vector_store %arg6[%c0_18, %c0_19], %33 {strides = array<i32>} : memref<8x128xf32, #tpu.memory_space<vmem>>, vector<8x128xf32>,
    return
  }
  func.func @transform_0(%arg0: i32) -> (i32, i32) {
    %c0_i32 = arith.constant 0 : i32
    %c0_i32_0 = arith.constant 0 : i32
    return %arg0, %c0_i32 : i32, i32
  }
  func.func @transform_1(%arg0: i32) -> (i32, i32) {
    %c0_i32 = arith.constant 0 : i32
    %c0_i32_0 = arith.constant 0 : i32
    %c0_i32_1 = arith.constant 0 : i32
    return %c0_i32, %c0_i32_0 : i32, i32
  }
  func.func @transform_2(%arg0: i32) -> (i32, i32) {
    %c0_i32 = arith.constant 0 : i32
    %c0_i32_0 = arith.constant 0 : i32
    %c0_i32_1 = arith.constant 0 : i32
    return %c0_i32, %c0_i32_0 : i32, i32
  }
  func.func @transform_3(%arg0: i32) -> (i32, i32) {
    %c0_i32 = arith.constant 0 : i32
    %c0_i32_0 = arith.constant 0 : i32
    %c0_i32_1 = arith.constant 0 : i32
    return %c0_i32, %c0_i32_0 : i32, i32
  }
  func.func @transform_4(%arg0: i32) -> (i32, i32) {
    %c0_i32 = arith.constant 0 : i32
    %c0_i32_0 = arith.constant 0 : i32
    %c0_i32_1 = arith.constant 0 : i32
    return %c0_i32, %c0_i32_0 : i32, i32
  }
  func.func @transform_5(%arg0: i32) -> (i32, i32) {
    %c0_i32 = arith.constant 0 : i32
    %c0_i32_0 = arith.constant 0 : i32
    return %arg0, %c0_i32 : i32, i32
  }
}

</mosaic_0001>

<llo_original>
// kernel: tpu_custom_call.1
$region0: #{tpu_custom_call.1}
  #allocation0 [shape = 'u32[]', space=smem, size = 0x4, offset = 0x4, fixed_abs, tag = 'smem constant byte address 0x4 - core index']
  #allocation1 [shape = 'u32[144,128]{1,0:T(1,128)}', space=vmem, size = 0x12000, scoped, tag = 'internal scratch']
  %s0 = inlined_call_operand.hbm [shape: f32[8,32], index: 0, kind: input, shape index: {}]
  %s1 = inlined_call_operand.hbm [shape: bf16[32,128], index: 1, kind: input, shape index: {}]
  %s2 = inlined_call_operand.hbm [shape: bf16[128,128], index: 2, kind: input, shape index: {}]
  %s3 = inlined_call_operand.hbm [shape: bf16[128,128], index: 3, kind: input, shape index: {}]
  %s4 = inlined_call_operand.vmem [shape: f32[3,128], index: 4, kind: input, shape index: {}]
  %s5 = inlined_call_operand.hbm [shape: f32[8,128], index: 5, kind: output, shape index: {}]
  %s6 = sld [smem:[#allocation0]]
  $region46: #{tpu_custom_call.1} parent=0
    _
  %s8 = ssub.s32 1, %s6
  %s9 = scalar_select 0, %s8, %s6
  $region1: #{tpu_custom_call.1} parent=0
    #allocation2 [shape = 'u8[4096]{0}', space=vmem, size = 0x1000, scoped, tag = 'input window, operand 0, single buffered']
    #allocation3 [shape = 's32[1]{0}', space=sflag, size = 0x4, scoped, tag = 'scoped memory for tpu_custom_call.1']
    #allocation4 [shape = 's32[1]{0}', space=sflag, size = 0x4, scoped, tag = 'scoped memory for tpu_custom_call.1']
    #allocation5 [shape = 'u8[8192]{0}', space=vmem, size = 0x2000, scoped, tag = 'input window, operand 1, single buffered']
    #allocation6 [shape = 's32[1]{0}', space=sflag, size = 0x4, scoped, tag = 'scoped memory for tpu_custom_call.1']
    #allocation7 [shape = 'u8[32768]{0}', space=vmem, size = 0x8000, scoped, tag = 'input window, operand 2, single buffered']
    #allocation8 [shape = 'u8[32768]{0}', space=vmem, size = 0x8000, scoped, tag = 'input window, operand 3, single buffered']
    #allocation9 [shape = 's32[1]{0}', space=sflag, size = 0x4, scoped, tag = 'scoped memory for tpu_custom_call.1']
    #allocation10 [shape = 'u8[4096]{0}', space=vmem, size = 0x1000, scoped, tag = 'output window, operand 0, single buffered']
    %10 = vsyncpa [#allocation3], 0
    %11 = vsyncpa [#allocation6], 0
    %12 = vsyncpa [#allocation9], 0
    %13 = vsyncpa [#allocation4], 0
    // Predicated region
    $region2: #{tpu_custom_call.1} parent=1 // pred_check
      _
    $region3: #{tpu_custom_call.1} parent=1 // pred_check_branch
      %15 = sbr.rel (0) target = $region5
    $region4: #{tpu_custom_call.1} parent=1 // pred_region
      %s17 = ssub.s32 128, 128
      %18 = vsyncadd [#allocation3], %s17
      %s20 = sshll.u32 [#allocation2], 4
      %s21 = int_to_ptr.vmem [resolvable:$true] %s20
      %23 = dma.hbm_to_vmem [thread:$0]  %s0, 128, %s21, [#allocation3]
    $region5: #{tpu_custom_call.1} parent=1 // pred_fallthru
      _
    // Predicated region
    $region6: #{tpu_custom_call.1} parent=1 // pred_check
      _
    $region7: #{tpu_custom_call.1} parent=1 // pred_check_branch
      %25 = sbr.rel (0) target = $region9
    $region8: #{tpu_custom_call.1} parent=1 // pred_region
      %s27 = ssub.s32 256, 256
      %28 = vsyncadd [#allocation6], %s27
      %s29 = sshll.u32 [#allocation5], 4
      %s30 = int_to_ptr.vmem [resolvable:$true] %s29
      %35 = dma.hbm_to_vmem [thread:$0]  %s1, 256, %s30, [#allocation6], 64, 64, 4
    $region9: #{tpu_custom_call.1} parent=1 // pred_fallthru
      _
    // Predicated region
    $region10: #{tpu_custom_call.1} parent=1 // pred_check
      _
    $region11: #{tpu_custom_call.1} parent=1 // pred_check_branch
      %37 = sbr.rel (0) target = $region13
    $region12: #{tpu_custom_call.1} parent=1 // pred_region
      %s39 = ssub.s32 1024, 1024
      %40 = vsyncadd [#allocation6], %s39
      %s41 = sshll.u32 [#allocation7], 4
      %s42 = int_to_ptr.vmem [resolvable:$true] %s41
      %47 = dma.hbm_to_vmem [thread:$0]  %s2, 1024, %s42, [#allocation6], 64, 64, 4
    $region13: #{tpu_custom_call.1} parent=1 // pred_fallthru
      _
    // Predicated region
    $region14: #{tpu_custom_call.1} parent=1 // pred_check
      _
    $region15: #{tpu_custom_call.1} parent=1 // pred_check_branch
      %49 = sbr.rel (0) target = $region17
    $region16: #{tpu_custom_call.1} parent=1 // pred_region
      %s51 = ssub.s32 1024, 1024
      %52 = vsyncadd [#allocation9], %s51
      %s53 = sshll.u32 [#allocation8], 4
      %s54 = int_to_ptr.vmem [resolvable:$true] %s53
      %59 = dma.hbm_to_vmem [thread:$0]  %s3, 1024, %s54, [#allocation9], 64, 64, 4
    $region17: #{tpu_custom_call.1} parent=1 // pred_fallthru
      _
    // Predicated region
    $region18: #{tpu_custom_call.1} parent=1 // pred_check
      _
    $region19: #{tpu_custom_call.1} parent=1 // pred_check_branch
      %61 = sbr.rel (0) target = $region21
    $region20: #{tpu_custom_call.1} parent=1 // pred_region
      _
    $region21: #{tpu_custom_call.1} parent=1 // pred_fallthru
      _
    // Predicated region
    $region22: #{tpu_custom_call.1} parent=1 // pred_check
      _
    $region23: #{tpu_custom_call.1} parent=1 // pred_check_branch
      %63 = sbr.rel (0) target = $region25
    $region24: #{tpu_custom_call.1} parent=1 // pred_region
      %64 = dma.done [#allocation3], 128
    $region25: #{tpu_custom_call.1} parent=1 // pred_fallthru
      _
    // Predicated region
    $region26: #{tpu_custom_call.1} parent=1 // pred_check
      _
    $region27: #{tpu_custom_call.1} parent=1 // pred_check_branch
      %66 = sbr.rel (0) target = $region29
    $region28: #{tpu_custom_call.1} parent=1 // pred_region
      %67 = dma.done [#allocation6], 256
    $region29: #{tpu_custom_call.1} parent=1 // pred_fallthru
      _
    // Predicated region
    $region30: #{tpu_custom_call.1} parent=1 // pred_check
      _
    $region31: #{tpu_custom_call.1} parent=1 // pred_check_branch
      %69 = sbr.rel (0) target = $region33
    $region32: #{tpu_custom_call.1} parent=1 // pred_region
      %70 = dma.done [#allocation6], 1024
    $region33: #{tpu_custom_call.1} parent=1 // pred_fallthru
      _
    // Predicated region
    $region34: #{tpu_custom_call.1} parent=1 // pred_check
      _
    $region35: #{tpu_custom_call.1} parent=1 // pred_check_branch
      %72 = sbr.rel (0) target = $region37
    $region36: #{tpu_custom_call.1} parent=1 // pred_region
      %73 = dma.done [#allocation9], 1024
    $region37: #{tpu_custom_call.1} parent=1 // pred_fallthru
      _
    %v75 = vld [vmem:[#allocation2] sm:$0xff]
    %v76 = vpack.c.bf16 %v75, %v75
    %v77 = vld [vmem:[#allocation5] sm:$0xf]
    %v78 = vld [vmem:[#allocation5 + $0x4] sm:$0xf]
    %v79 = vld [vmem:[#allocation5 + $0x8] sm:$0xf]
    %v80 = vld [vmem:[#allocation5 + $0xc] sm:$0xf]
    %v81 = vld [vmem:[%s4] sm:$0x1]
    %v82 = vlaneseq
    %v83 = vshrl.u32 %v82, 7
    %v84 = vsub.s32 0, %v83
    %v85 = vrot.slane %v81, %v84
    %v90 = vunpack.c.l.b16 %v77
    %v91 = vunpack.c.l.b16 %v78
    %v92 = vunpack.c.l.b16 %v79
    %v93 = vunpack.c.l.b16 %v80
    %v94 = vpack.c.b16 %v91, %v90
    %v95 = vpack.c.b16 %v93, %v92
    %vm98 = vcmask 261120
    %v100 = vsel %vm98, %v76, 0
    %102 = vmatprep.subr.bf16.mxu0 0
    %103 = vmatpush1.bf16.msra.mxu0 %v94
    %104 = vmatprep.subr.bf16.mxu0 0
    %105 = vmatpush1.bf16.msra.mxu0 %v95
    %106 = vmatprep.subr.bf16.mxu0 0
    %107 = vmatpush1.bf16.msra.mxu0 0
    %108 = vmatprep.subr.bf16.mxu0 0
    %109 = vmatpush1.bf16.msra.mxu0 0
    %110 = vmatprep.subr.bf16.mxu0 0
    %111 = vmatpush1.bf16.msra.mxu0 0
    %112 = vmatprep.subr.bf16.mxu0 0
    %113 = vmatpush1.bf16.msra.mxu0 0
    %114 = vmatprep.subr.bf16.mxu0 0
    %115 = vmatpush1.bf16.msra.mxu0 0
    %116 = vmatprep.subr.bf16.mxu0 0
    %117 = vmatpush1.bf16.msra.mxu0 0
    %118 = vmatprep.subr.bf16.mxu0 0
    %119 = vmatpush1.bf16.msra.mxu0 0
    %120 = vmatprep.subr.bf16.mxu0 0
    %121 = vmatpush1.bf16.msra.mxu0 0
    %122 = vmatprep.subr.bf16.mxu0 0
    %123 = vmatpush1.bf16.msra.mxu0 0
    %124 = vmatprep.subr.bf16.mxu0 0
    %125 = vmatpush1.bf16.msra.mxu0 0
    %126 = vmatprep.subr.bf16.mxu0 0
    %127 = vmatpush1.bf16.msra.mxu0 0
    %128 = vmatprep.subr.bf16.mxu0 0
    %129 = vmatpush1.bf16.msra.mxu0 0
    %130 = vmatprep.subr.bf16.mxu0 0
    %131 = vmatpush1.bf16.msra.mxu0 0
    %132 = vmatprep.subr.bf16.mxu0 0
    %133 = vmatpush1.bf16.msra.mxu0 0
    %134 = vmatprep.mubr.bf16.mxu0 0
    %135 = vmatmul.mubr.bf16.gmra.mrb[0].mxu0 %v100
    %v136 = vpop.f32.mrb[0].mxu0
    %v137 = vadd.f32 %v85, %v136
    %v138 = vpop.f32.mrb[0].mxu0
    %v139 = vpop.f32.mrb[0].mxu0
    %v140 = vpop.f32.mrb[0].mxu0
    %141 = vdwg.mxu0
    %v142 = vmax.f32 %v137, 0.0
    %v143 = vpack.c.bf16 %v142, %v142
    %v144 = vld [vmem:[#allocation7] sm:$0xf]
    %v145 = vld [vmem:[#allocation7 + $0x4] sm:$0xf]
    %v146 = vld [vmem:[#allocation7 + $0x8] sm:$0xf]
    %v147 = vld [vmem:[#allocation7 + $0xc] sm:$0xf]
    %v148 = vld [vmem:[#allocation7 + $0x10] sm:$0xf]
    %v149 = vld [vmem:[#allocation7 + $0x14] sm:$0xf]
    %v150 = vld [vmem:[#allocation7 + $0x18] sm:$0xf]
    %v151 = vld [vmem:[#allocation7 + $0x1c] sm:$0xf]
    %v152 = vld [vmem:[#allocation7 + $0x20] sm:$0xf]
    %v153 = vld [vmem:[#allocation7 + $0x24] sm:$0xf]
    %v154 = vld [vmem:[#allocation7 + $0x28] sm:$0xf]
    %v155 = vld [vmem:[#allocation7 + $0x2c] sm:$0xf]
    %v156 = vld [vmem:[#allocation7 + $0x30] sm:$0xf]
    %v157 = vld [vmem:[#allocation7 + $0x34] sm:$0xf]
    %v158 = vld [vmem:[#allocation7 + $0x38] sm:$0xf]
    %v159 = vld [vmem:[#allocation7 + $0x3c] sm:$0xf]
    %v160 = vld [vmem:[%s4 + $0x1] sm:$0x1]
    %v161 = vlaneseq
    %v162 = vshrl.u32 %v161, 7
    %v163 = vsub.s32 0, %v162
    %v164 = vrot.slane %v160, %v163
    %v181 = vunpack.c.l.b16 %v144
    %v182 = vunpack.c.l.b16 %v145
    %v183 = vunpack.c.l.b16 %v146
    %v184 = vunpack.c.l.b16 %v147
    %v185 = vunpack.c.l.b16 %v148
    %v186 = vunpack.c.l.b16 %v149
    %v187 = vunpack.c.l.b16 %v150
    %v188 = vunpack.c.l.b16 %v151
    %v189 = vunpack.c.l.b16 %v152
    %v190 = vunpack.c.l.b16 %v153
    %v191 = vunpack.c.l.b16 %v154
    %v192 = vunpack.c.l.b16 %v155
    %v193 = vunpack.c.l.b16 %v156
    %v194 = vunpack.c.l.b16 %v157
    %v195 = vunpack.c.l.b16 %v158
    %v196 = vunpack.c.l.b16 %v159
    %v197 = vpack.c.b16 %v182, %v181
    %v198 = vpack.c.b16 %v184, %v183
    %v199 = vpack.c.b16 %v186, %v185
    %v200 = vpack.c.b16 %v188, %v187
    %v201 = vpack.c.b16 %v190, %v189
    %v202 = vpack.c.b16 %v192, %v191
    %v203 = vpack.c.b16 %v194, %v193
    %v204 = vpack.c.b16 %v196, %v195
    %213 = vmatprep.subr.bf16.mxu0 0
    %214 = vmatpush1.bf16.msra.mxu0 %v197
    %215 = vmatprep.subr.bf16.mxu0 0
    %216 = vmatpush1.bf16.msra.mxu0 %v198
    %217 = vmatprep.subr.bf16.mxu0 0
    %218 = vmatpush1.bf16.msra.mxu0 %v199
    %219 = vmatprep.subr.bf16.mxu0 0
    %220 = vmatpush1.bf16.msra.mxu0 %v200
    %221 = vmatprep.subr.bf16.mxu0 0
    %222 = vmatpush1.bf16.msra.mxu0 %v201
    %223 = vmatprep.subr.bf16.mxu0 0
    %224 = vmatpush1.bf16.msra.mxu0 %v202
    %225 = vmatprep.subr.bf16.mxu0 0
    %226 = vmatpush1.bf16.msra.mxu0 %v203
    %227 = vmatprep.subr.bf16.mxu0 0
    %228 = vmatpush1.bf16.msra.mxu0 %v204
    %229 = vmatprep.subr.bf16.mxu0 0
    %230 = vmatpush1.bf16.msra.mxu0 0
    %231 = vmatprep.subr.bf16.mxu0 0
    %232 = vmatpush1.bf16.msra.mxu0 0
    %233 = vmatprep.subr.bf16.mxu0 0
    %234 = vmatpush1.bf16.msra.mxu0 0
    %235 = vmatprep.subr.bf16.mxu0 0
    %236 = vmatpush1.bf16.msra.mxu0 0
    %237 = vmatprep.subr.bf16.mxu0 0
    %238 = vmatpush1.bf16.msra.mxu0 0
    %239 = vmatprep.subr.bf16.mxu0 0
    %240 = vmatpush1.bf16.msra.mxu0 0
    %241 = vmatprep.subr.bf16.mxu0 0
    %242 = vmatpush1.bf16.msra.mxu0 0
    %243 = vmatprep.subr.bf16.mxu0 0
    %244 = vmatpush1.bf16.msra.mxu0 0
    %245 = vmatprep.mubr.bf16.mxu0 0
    %246 = vmatmul.mubr.bf16.gmra.mrb[0].mxu0 %v143
    %v247 = vpop.f32.mrb[0].mxu0
    %v248 = vadd.f32 %v164, %v247
    %v249 = vpop.f32.mrb[0].mxu0
    %v250 = vpop.f32.mrb[0].mxu0
    %v251 = vpop.f32.mrb[0].mxu0
    %252 = vdwg.mxu0
    %v253 = vmax.f32 %v248, 0.0
    %v254 = vpack.c.bf16 %v253, %v253
    %v255 = vld [vmem:[#allocation8] sm:$0xf]
    %v256 = vld [vmem:[#allocation8 + $0x4] sm:$0xf]
    %v257 = vld [vmem:[#allocation8 + $0x8] sm:$0xf]
    %v258 = vld [vmem:[#allocation8 + $0xc] sm:$0xf]
    %v259 = vld [vmem:[#allocation8 + $0x10] sm:$0xf]
    %v260 = vld [vmem:[#allocation8 + $0x14] sm:$0xf]
    %v261 = vld [vmem:[#allocation8 + $0x18] sm:$0xf]
    %v262 = vld [vmem:[#allocation8 + $0x1c] sm:$0xf]
    %v263 = vld [vmem:[#allocation8 + $0x20] sm:$0xf]
    %v264 = vld [vmem:[#allocation8 + $0x24] sm:$0xf]
    %v265 = vld [vmem:[#allocation8 + $0x28] sm:$0xf]
    %v266 = vld [vmem:[#allocation8 + $0x2c] sm:$0xf]
    %v267 = vld [vmem:[#allocation8 + $0x30] sm:$0xf]
    %v268 = vld [vmem:[#allocation8 + $0x34] sm:$0xf]
    %v269 = vld [vmem:[#allocation8 + $0x38] sm:$0xf]
    %v270 = vld [vmem:[#allocation8 + $0x3c] sm:$0xf]
    %v271 = vld [vmem:[%s4 + $0x2] sm:$0x1]
    %v272 = vlaneseq
    %v273 = vshrl.u32 %v272, 7
    %v274 = vsub.s32 0, %v273
    %v275 = vrot.slane %v271, %v274
    %v292 = vunpack.c.l.b16 %v255
    %v293 = vunpack.c.l.b16 %v256
    %v294 = vunpack.c.l.b16 %v257
    %v295 = vunpack.c.l.b16 %v258
    %v296 = vunpack.c.l.b16 %v259
    %v297 = vunpack.c.l.b16 %v260
    %v298 = vunpack.c.l.b16 %v261
    %v299 = vunpack.c.l.b16 %v262
    %v300 = vunpack.c.l.b16 %v263
    %v301 = vunpack.c.l.b16 %v264
    %v302 = vunpack.c.l.b16 %v265
    %v303 = vunpack.c.l.b16 %v266
    %v304 = vunpack.c.l.b16 %v267
    %v305 = vunpack.c.l.b16 %v268
    %v306 = vunpack.c.l.b16 %v269
    %v307 = vunpack.c.l.b16 %v270
    %v308 = vpack.c.b16 %v293, %v292
    %v309 = vpack.c.b16 %v295, %v294
    %v310 = vpack.c.b16 %v297, %v296
    %v311 = vpack.c.b16 %v299, %v298
    %v312 = vpack.c.b16 %v301, %v300
    %v313 = vpack.c.b16 %v303, %v302
    %v314 = vpack.c.b16 %v305, %v304
    %v315 = vpack.c.b16 %v307, %v306
    %324 = vmatprep.subr.bf16.mxu0 0
    %325 = vmatpush1.bf16.msra.mxu0 %v308
    %326 = vmatprep.subr.bf16.mxu0 0
    %327 = vmatpush1.bf16.msra.mxu0 %v309
    %328 = vmatprep.subr.bf16.mxu0 0
    %329 = vmatpush1.bf16.msra.mxu0 %v310
    %330 = vmatprep.subr.bf16.mxu0 0
    %331 = vmatpush1.bf16.msra.mxu0 %v311
    %332 = vmatprep.subr.bf16.mxu0 0
    %333 = vmatpush1.bf16.msra.mxu0 %v312
    %334 = vmatprep.subr.bf16.mxu0 0
    %335 = vmatpush1.bf16.msra.mxu0 %v313
    %336 = vmatprep.subr.bf16.mxu0 0
    %337 = vmatpush1.bf16.msra.mxu0 %v314
    %338 = vmatprep.subr.bf16.mxu0 0
    %339 = vmatpush1.bf16.msra.mxu0 %v315
    %340 = vmatprep.subr.bf16.mxu0 0
    %341 = vmatpush1.bf16.msra.mxu0 0
    %342 = vmatprep.subr.bf16.mxu0 0
    %343 = vmatpush1.bf16.msra.mxu0 0
    %344 = vmatprep.subr.bf16.mxu0 0
    %345 = vmatpush1.bf16.msra.mxu0 0
    %346 = vmatprep.subr.bf16.mxu0 0
    %347 = vmatpush1.bf16.msra.mxu0 0
    %348 = vmatprep.subr.bf16.mxu0 0
    %349 = vmatpush1.bf16.msra.mxu0 0
    %350 = vmatprep.subr.bf16.mxu0 0
    %351 = vmatpush1.bf16.msra.mxu0 0
    %352 = vmatprep.subr.bf16.mxu0 0
    %353 = vmatpush1.bf16.msra.mxu0 0
    %354 = vmatprep.subr.bf16.mxu0 0
    %355 = vmatpush1.bf16.msra.mxu0 0
    %356 = vmatprep.mubr.bf16.mxu0 0
    %357 = vmatmul.mubr.bf16.gmra.mrb[0].mxu0 %v254
    %v358 = vpop.f32.mrb[0].mxu0
    %v359 = vadd.f32 %v275, %v358
    %v360 = vpop.f32.mrb[0].mxu0
    %v361 = vpop.f32.mrb[0].mxu0
    %v362 = vpop.f32.mrb[0].mxu0
    %363 = vdwg.mxu0
    %364 = vmax.xlane.f32.xlu0 %v359
    %v365 = vpop.xlane.xlu0 %364
    %v366 = vsub.f32 %v359, %v365
    %v367 = vmul.f32 %v366, 1.442695
    %v368 = vpow.pop %v367
    %369 = vadd.xlane.f32.xlu0 %v368
    %v370 = vpop.xlane.xlu0 %369
    %v371 = vrcp.pop %v370
    %v372 = vmul.f32 1.0, %v371
    %v373 = vmul.f32 %v368, %v372
    %374 = vst [vmem:[#allocation10] sm:$0xff] %v373
    // Predicated region
    $region38: #{tpu_custom_call.1} parent=1 // pred_check
      _
    $region39: #{tpu_custom_call.1} parent=1 // pred_check_branch
      %376 = sbr.rel (0) target = $region41
    $region40: #{tpu_custom_call.1} parent=1 // pred_region
      %s378 = ssub.s32 128, 128
      %379 = vsyncadd [#allocation4], %s378
      %s381 = sshll.u32 [#allocation10], 4
      %s382 = int_to_ptr.vmem [resolvable:$true] %s381
      %384 = dma.vmem_to_hbm [thread:$0]  %s382, 128, %s5, [#allocation4]
    $region41: #{tpu_custom_call.1} parent=1 // pred_fallthru
      _
    // Predicated region
    $region42: #{tpu_custom_call.1} parent=1 // pred_check
      _
    $region43: #{tpu_custom_call.1} parent=1 // pred_check_branch
      %386 = sbr.rel (0) target = $region45
    $region44: #{tpu_custom_call.1} parent=1 // pred_region
      %387 = dma.done [#allocation4], 128
    $region45: #{tpu_custom_call.1} parent=1 // pred_fallthru
      _
    %388 = vsyncpa [#allocation3], 1
    %389 = vsyncpa [#allocation6], 1
    %390 = vsyncpa [#allocation9], 1
    %391 = vsyncpa [#allocation4], 1

</llo_original>
